<compile_context>
chip_gen: v6e
topology: v6e:2x2x1
jax: 0.10.0
libtpu: 0.0.40
codegen_flags: <defaults>
</compile_context>

<pallas_src>
import math

import jax
import jax.numpy as jnp
from jax import lax
from jax.experimental import pallas as pl
from jax.experimental.pallas import tpu as pltpu


def _ecvq_kernel(x_ref, cbt_ref, cbaug_ref, bias_ref, out_ref):
    # x_ref    : (tn, cb_dim)        input rows for this (codebook, N-tile)
    # cbt_ref  : (cb_dim, cb_size)   -2 * codebook^T (scale folded in wrapper)
    # cbaug_ref: (cb_size, aug_w)    [codebook | log2_pmf_u | zero pad]
    # bias_ref : (1, cb_size)        ||cb||^2 + log2_pmf/lmbda (per-row const)
    # out_ref  : (tn, aug_w)         [x_hat | rate | index | zero pad]
    cb_dim = x_ref.shape[1]
    x = x_ref[...].astype(jnp.float32)

    # Distance up to the per-row constant ||x||^2 (same argmin as the module):
    # one MXU matmul + one VPU add over the (tn, cb_size) slab.
    dist = jnp.dot(x, cbt_ref[...].astype(jnp.float32),
                   preferred_element_type=jnp.float32) + bias_ref[...].astype(jnp.float32)

    # First-occurrence argmin over the lane (cb_size) axis, like torch.argmin.
    min_d = jnp.min(dist, axis=-1, keepdims=True)                       # (tn, 1)
    lane = lax.broadcasted_iota(jnp.int32, dist.shape, 1).astype(jnp.float32)
    big = jnp.float32(dist.shape[-1])
    idx_f = jnp.min(jnp.where(dist == min_d, lane, big),
                    axis=-1, keepdims=True)                             # (tn, 1) exact f32 index
    one_hot = (lane == idx_f).astype(jnp.float32)                       # (tn, cb_size)

    # Fused reconstruction + rate gather on the MXU:
    #   cols [0:cb_dim] = x_hat, col cb_dim = log2_pmf_u[index].
    res = jnp.dot(one_hot, cbaug_ref[...].astype(jnp.float32),
                  preferred_element_type=jnp.float32)                   # (tn, aug_w)

    # Inject the exact index into its reserved column (tiny (tn, aug_w) select;
    # avoids a separate lane-sparse index output and any MXU rounding concerns).
    col = lax.broadcasted_iota(jnp.int32, res.shape, 1)
    res = jnp.where(col == (cb_dim + 1), idx_f, res)

    out_ref[...] = res.astype(out_ref.dtype)


def conditional_vq(x, codebook, rate_bias=None, log2_pmf_u=None, tile_n=1024):
    """Fused entropy-constrained VQ (ConditionalVectorQuantization + rate_uem).

    Args:
      x:          (N, ncb, cb_dim)
      codebook:   (ncb or 1, cb_size, cb_dim)
      rate_bias:  (ncb or 1, cb_size) or None   (log2_pmf / lmbda)
      log2_pmf_u: (ncb or 1, cb_size) or None   (unconditional log2 pmf)
    Returns:
      x_hat (N, ncb, cb_dim), index (N, ncb, 1) int32, rate_rows (ncb, N) f32
      with rate_rows[a, n] = log2_pmf_u[a, index[n, a]].
    """
    N, ncb, cb_dim = x.shape
    ncb_cb, cb_size, _ = codebook.shape
    f32 = jnp.float32

    if log2_pmf_u is None:
        log2_pmf_u = jnp.zeros((ncb_cb, cb_size), f32)

    cb_f = codebook.astype(f32)

    # Per-codeword row constant: ||cb_b||^2 (+ rate bias). ||x||^2 is dropped
    # because it is constant per row and cannot change the argmin.
    row_const = jnp.sum(cb_f * cb_f, axis=-1)                       # (ncb_cb, cb_size)
    if rate_bias is not None:
        row_const = row_const + rate_bias.astype(f32)
    bias3 = row_const.reshape(ncb_cb, 1, cb_size)

    # -2 folded into the transposed codebook: dist' = x @ cbt + row_const.
    cbt = -2.0 * jnp.transpose(cb_f, (0, 2, 1))                     # (ncb_cb, cb_dim, cb_size)

    # Augmented codebook: one MXU matmul yields [x_hat | rate | (index col)].
    aug_w = max(8, ((cb_dim + 2 + 7) // 8) * 8)
    cb_aug = jnp.concatenate([
        cb_f,
        log2_pmf_u.astype(f32)[..., None],
        jnp.zeros((ncb_cb, cb_size, aug_w - cb_dim - 1), f32),
    ], axis=-1)                                                     # (ncb_cb, cb_size, aug_w)

    # N tiling (sublane-friendly). The single wrapper transpose of x is
    # negligible vs. the compute-bound (tn, cb_size) slab work per step.
    n8 = max(8, ((N + 7) // 8) * 8)
    tn = max(8, (min(tile_n, n8) // 8) * 8)
    n_pad = ((n8 + tn - 1) // tn) * tn
    x_t = jnp.transpose(x, (1, 0, 2))                               # (ncb, N, cb_dim)
    if n_pad != N:
        x_t = jnp.pad(x_t, ((0, 0), (0, n_pad - N), (0, 0)))

    # share_codebook: single-slot codebook/bias blocks stay VMEM-resident
    # (constant index_map) instead of being broadcast & re-DMA'd per codebook.
    cb_map = (lambda a, j: (0, 0, 0)) if ncb_cb == 1 else (lambda a, j: (a, 0, 0))

    out = pl.pallas_call(
        _ecvq_kernel,
        out_shape=jax.ShapeDtypeStruct((ncb, n_pad, aug_w), jnp.float32),
        grid_spec=pltpu.PrefetchScalarGridSpec(
            num_scalar_prefetch=0,
            grid=(ncb, n_pad // tn),
            in_specs=[
                pl.BlockSpec((None, tn, cb_dim), lambda a, j: (a, j, 0)),   # x tile
                pl.BlockSpec((None, cb_dim, cb_size), cb_map),              # -2*cb^T
                pl.BlockSpec((None, cb_size, aug_w), cb_map),               # [cb|lpmf|0]
                pl.BlockSpec((None, 1, cb_size), cb_map),                   # row const
            ],
            out_specs=pl.BlockSpec((None, tn, aug_w), lambda a, j: (a, j, 0)),
        ),
        compiler_params=pltpu.CompilerParams(
            dimension_semantics=("parallel", "parallel"),
            vmem_limit_bytes=48 * 1024 * 1024),
    )(x_t, cbt, cb_aug, bias3)

    x_hat = jnp.transpose(out[:, :N, :cb_dim], (1, 0, 2)).astype(x.dtype)   # (N, ncb, cb_dim)
    rate_rows = out[:, :N, cb_dim]                                          # (ncb, N)
    index = jnp.transpose(out[:, :N, cb_dim + 1], (1, 0)).astype(jnp.int32)[..., None]
    return x_hat, index, rate_rows


def ecvq_forward(x, codebook, logits, lmbda, rate_constrain=True):
    """ECVQlastdim.forward with prior_param=None (unconditional entropy model).

    Returns (x_hat, rate_uem, rate_cem, prior_dist, param_bit) like the module.
    """
    # TODO(synk): prior_param path (DeepConditionalPriorFn / DiscreteConditional-
    # EntropyModel) and the range-coder compress/decompress are not implemented.
    orig_shape = x.shape
    xf = x.reshape(-1, orig_shape[-2], orig_shape[-1])

    # uncondi_entropy_model.log_pmf() / -log(2)  == log_softmax(logits) / -ln2
    log2_pmf_u = jax.nn.log_softmax(logits, axis=-1) * (-1.0 / math.log(2.0))
    rate_bias = (log2_pmf_u / lmbda) if rate_constrain else None

    x_hat, _index, rate_rows = conditional_vq(xf, codebook, rate_bias, log2_pmf_u)

    rate_uem = jnp.sum(rate_rows)                 # == (one_hot * log2_pmf_u).sum()
    rate_cem = jnp.zeros_like(rate_uem)           # prior_param is None
    prior_dist = jnp.zeros((1,), x.dtype)
    param_bit = jnp.zeros((1,), x.dtype)
    return x_hat.reshape(orig_shape), rate_uem, rate_cem, prior_dist, param_bit


def ref_ecvq(x, codebook, logits, lmbda, rate_constrain=True):
    """Pure-JAX/XLA reference mirroring the PyTorch module exactly."""
    log2_pmf = jax.nn.log_softmax(logits, axis=-1) * (-1.0 / math.log(2.0))
    x_sq = jnp.sum(x * x, axis=-1, keepdims=True)                 # (N, ncb, 1)
    cb_sq = jnp.sum(codebook * codebook, axis=-1)                 # (ncb, cb_size)
    cross = jnp.einsum('abc,dac->dab', codebook, x)               # (N, ncb, cb_size)
    dist = x_sq + cb_sq[None] - 2.0 * cross
    if rate_constrain:
        dist = log2_pmf[None] / lmbda + dist
    index = jnp.argmin(dist, axis=-1)                             # (N, ncb)
    one_hot = jax.nn.one_hot(index, codebook.shape[1], dtype=jnp.float32)
    x_hat = jnp.einsum('abc,bcd->abd', one_hot, codebook)
    rate_uem = jnp.sum(one_hot * log2_pmf[None])
    return x_hat, index, rate_uem, dist


if __name__ == "__main__":
    # Shapes implied by the module defaults: event_shape=(16, 4), cb_size=1024.
    N, ncb, cb_dim, cb_size = 8, 16, 4, 1024
    lmbda = 100.0

    key = jax.random.PRNGKey(0)
    kx, kc, kl = jax.random.split(key, 3)
    x = jax.random.normal(kx, (N, ncb, cb_dim), jnp.float32)
    codebook = jax.random.normal(kc, (ncb, cb_size, cb_dim), jnp.float32) / math.sqrt(cb_dim)
    logits = 0.01 * jax.random.normal(kl, (ncb, cb_size), jnp.float32)

    log2_pmf_u = jax.nn.log_softmax(logits, axis=-1) * (-1.0 / math.log(2.0))

    # Fused Pallas VQ (direct) and the module-level forward.
    quant = jax.jit(lambda x_, cb_, lp_: conditional_vq(x_, cb_, lp_ / lmbda, lp_))
    x_hat, index, rate_rows = jax.block_until_ready(quant(x, codebook, log2_pmf_u))

    fwd = jax.jit(ecvq_forward)
    x_hat_m, rate_uem, rate_cem, prior_dist, param_bit = jax.block_until_ready(
        fwd(x, codebook, logits, lmbda))

    # Pure-JAX reference (mirrors the PyTorch module, including ||x||^2 term).
    x_hat_ref, index_ref, rate_ref, dist_ref = ref_ecvq(x, codebook, logits, lmbda)

    idx = index[..., 0]                                            # (N, ncb) int32
    assert x_hat.shape == (N, ncb, cb_dim), x_hat.shape
    assert x_hat_m.shape == x.shape, x_hat_m.shape
    assert index.shape == (N, ncb, 1) and index.dtype == jnp.int32

    # 1) Chosen codeword minimizes the reference distance (tie-robust argmin check;
    #    dropping ||x||^2 changes dist values but not the minimizer).
    d_sel = jnp.take_along_axis(dist_ref, idx[..., None], axis=-1)[..., 0]
    d_min = jnp.min(dist_ref, axis=-1)
    gap_opt = float(jnp.max(d_sel - d_min))
    assert gap_opt < 1e-4, f"selected codeword not optimal: {gap_opt}"

    # 2) Exact index match wherever the reference argmin is numerically clear.
    top2 = jnp.sort(dist_ref, axis=-1)[..., :2]
    clear = (top2[..., 1] - top2[..., 0]) > 1e-3
    n_bad = int(jnp.sum((idx != index_ref) & clear))
    assert n_bad == 0, f"{n_bad} index mismatches at numerically-clear rows"

    # 3) x_hat equals the selected codeword and matches the reference where clear.
    cb_sel = codebook[jnp.arange(ncb)[None, :], idx]               # (N, ncb, cb_dim)
    assert float(jnp.max(jnp.abs(x_hat - cb_sel))) < 5e-2
    err = float(jnp.max(jnp.abs(x_hat - x_hat_ref) * clear[..., None]))
    assert err < 1e-4, f"x_hat max abs error {err}"
    err_m = float(jnp.max(jnp.abs(x_hat_m - x_hat_ref) * clear[..., None]))
    assert err_m < 1e-4, f"forward x_hat max abs error {err_m}"

    # 4) Rate plumbing: per-row rate == log2_pmf_u at the chosen index; totals match.
    lp_sel = log2_pmf_u[jnp.arange(ncb)[None, :], idx]             # (N, ncb)
    assert float(jnp.max(jnp.abs(rate_rows.T - lp_sel))) < 5e-2
    rel = abs(float(jnp.sum(rate_rows)) - float(rate_ref)) / max(1.0, abs(float(rate_ref)))
    assert rel < 1e-2, f"rate_uem rel error {rel}"
    rel_m = abs(float(rate_uem) - float(rate_ref)) / max(1.0, abs(float(rate_ref)))
    assert rel_m < 1e-2, f"forward rate_uem rel error {rel_m}"
    assert float(rate_cem) == 0.0 and float(prior_dist[0]) == 0.0 and float(param_bit[0]) == 0.0

    print("KERNEL_OK")
</pallas_src>

<mosaic_0001>
module attributes {stable_mosaic.version = 11 : i64} {
  func.func @_ecvq_kernel(%arg0: i32, %arg1: i32, %arg2: memref<1x8x4xf32, #tpu.memory_space<vmem>>, %arg3: memref<1x4x1024xf32, #tpu.memory_space<vmem>>, %arg4: memref<1x1024x8xf32, #tpu.memory_space<vmem>>, %arg5: memref<1x1x1024xf32, #tpu.memory_space<vmem>>, %arg6: memref<1x8x8xf32, #tpu.memory_space<vmem>>) attributes {dimension_semantics = [#tpu.dimension_semantics<parallel>, #tpu.dimension_semantics<parallel>], iteration_bounds = array<i64: 16, 1>, scalar_prefetch = 0 : i64, scratch_operands = 0 : i64, tpu.core_type = #tpu.core_type<tc>, window_params = [{transform_indices = @transform_0, window_bounds = array<i64: 1, 8, 4>}, {transform_indices = @transform_1, window_bounds = array<i64: 1, 4, 1024>}, {transform_indices = @transform_2, window_bounds = array<i64: 1, 1024, 8>}, {transform_indices = @transform_3, window_bounds = array<i64: 1, 1, 1024>}, {transform_indices = @transform_4, window_bounds = array<i64: 1, 8, 8>}]} {
    %c0 = arith.constant 0 : index
    %c0_0 = arith.constant 0 : index
    %c0_1 = arith.constant 0 : index
    %0 = vector.load %arg2[%c0, %c0_0, %c0_1] : memref<1x8x4xf32, #tpu.memory_space<vmem>>, vector<1x8x4xf32>
    %1 = vector.shape_cast %0 : vector<1x8x4xf32> to vector<8x4xf32>
    %c0_2 = arith.constant 0 : index
    %c0_3 = arith.constant 0 : index
    %c0_4 = arith.constant 0 : index
    %2 = vector.load %arg3[%c0_2, %c0_3, %c0_4] : memref<1x4x1024xf32, #tpu.memory_space<vmem>>, vector<1x4x1024xf32>
    %3 = vector.shape_cast %2 : vector<1x4x1024xf32> to vector<4x1024xf32>
    %cst = arith.constant dense<0.000000e+00> : vector<8x1024xf32>
    %4 = tpu.matmul %1, %3, %cst {dimension_numbers = #tpu.dot_dimension_numbers<[1], [0], [0], [1], [0, 0, 1, 1], [], []>} : vector<8x4xf32>, vector<4x1024xf32>, vector<8x1024xf32> -> vector<8x1024xf32>
    %c0_5 = arith.constant 0 : index
    %c0_6 = arith.constant 0 : index
    %c0_7 = arith.constant 0 : index
    %5 = vector.load %arg5[%c0_5, %c0_6, %c0_7] : memref<1x1x1024xf32, #tpu.memory_space<vmem>>, vector<1x1x1024xf32>
    %6 = vector.shape_cast %5 : vector<1x1x1024xf32> to vector<1x1024xf32>
    %7 = vector.broadcast %6 : vector<1x1024xf32> to vector<8x1024xf32>
    %8 = arith.addf %4, %7 : vector<8x1024xf32>
    %cst_8 = arith.constant dense<0x7F800000> : vector<8xf32>
    %9 = vector.multi_reduction <minimumf>, %8, %cst_8 [1] : vector<8x1024xf32> to vector<8xf32>
    %10 = vector.shape_cast %9 : vector<8xf32> to vector<8x1xf32>
    %11 = tpu.iota {dimensions = array<i32: 1>} : vector<8x1024xi32>
    %12 = arith.sitofp %11 : vector<8x1024xi32> to vector<8x1024xf32>
    %13 = vector.broadcast %10 : vector<8x1xf32> to vector<8x1024xf32>
    %14 = arith.cmpf oeq, %8, %13 : vector<8x1024xf32>
    %cst_9 = arith.constant 1.024000e+03 : f32
    %15 = vector.broadcast %cst_9 : f32 to vector<8x1024xf32>
    %16 = arith.select %14, %12, %15 : vector<8x1024xi1>, vector<8x1024xf32>
    %cst_10 = arith.constant dense<0x7F800000> : vector<8xf32>
    %17 = vector.multi_reduction <minimumf>, %16, %cst_10 [1] : vector<8x1024xf32> to vector<8xf32>
    %18 = vector.shape_cast %17 : vector<8xf32> to vector<8x1xf32>
    %19 = vector.broadcast %18 : vector<8x1xf32> to vector<8x1024xf32>
    %20 = arith.cmpf oeq, %12, %19 : vector<8x1024xf32>
    %21 = arith.extui %20 : vector<8x1024xi1> to vector<8x1024xi32>
    %22 = arith.sitofp %21 : vector<8x1024xi32> to vector<8x1024xf32>
    %c0_11 = arith.constant 0 : index
    %c0_12 = arith.constant 0 : index
    %c0_13 = arith.constant 0 : index
    %23 = vector.load %arg4[%c0_11, %c0_12, %c0_13] : memref<1x1024x8xf32, #tpu.memory_space<vmem>>, vector<1x1024x8xf32>
    %24 = vector.shape_cast %23 : vector<1x1024x8xf32> to vector<1024x8xf32>
    %cst_14 = arith.constant dense<0.000000e+00> : vector<8x8xf32>
    %25 = tpu.matmul %22, %24, %cst_14 {dimension_numbers = #tpu.dot_dimension_numbers<[1], [0], [0], [1], [0, 0, 1, 1], [], []>} : vector<8x1024xf32>, vector<1024x8xf32>, vector<8x8xf32> -> vector<8x8xf32>
    %26 = tpu.iota {dimensions = array<i32: 1>} : vector<8x8xi32>
    %c5_i32 = arith.constant 5 : i32
    %27 = vector.broadcast %c5_i32 : i32 to vector<8x8xi32>
    %28 = arith.cmpi eq, %26, %27 : vector<8x8xi32>
    %29 = vector.shape_cast %18 : vector<8x1xf32> to vector<8x1xf32>
    %30 = vector.broadcast %29 : vector<8x1xf32> to vector<8x8xf32>
    %31 = arith.select %28, %30, %25 : vector<8x8xi1>, vector<8x8xf32>
    %c0_15 = arith.constant 0 : index
    %c0_16 = arith.constant 0 : index
    %c0_17 = arith.constant 0 : index
    %32 = vector.load %arg6[%c0_15, %c0_16, %c0_17] : memref<1x8x8xf32, #tpu.memory_space<vmem>>, vector<1x8x8xf32>
    %33 = vector.shape_cast %32 : vector<1x8x8xf32> to vector<8x8xf32>
    %34 = vector.shape_cast %31 : vector<8x8xf32> to vector<1x8x8xf32>
    tpu.vector_store %arg6[%c0_15, %c0_16, %c0_17], %34 {strides = array<i32>} : memref<1x8x8xf32, #tpu.memory_space<vmem>>, vector<1x8x8xf32>,
    return
  }
  func.func @transform_0(%arg0: i32, %arg1: i32) -> (i32, i32, i32) {
    %c0_i32 = arith.constant 0 : i32
    %c0_i32_0 = arith.constant 0 : i32
    return %arg0, %arg1, %c0_i32 : i32, i32, i32
  }
  func.func @transform_1(%arg0: i32, %arg1: i32) -> (i32, i32, i32) {
    %c0_i32 = arith.constant 0 : i32
    %c0_i32_0 = arith.constant 0 : i32
    %c0_i32_1 = arith.constant 0 : i32
    return %arg0, %c0_i32, %c0_i32_0 : i32, i32, i32
  }
  func.func @transform_2(%arg0: i32, %arg1: i32) -> (i32, i32, i32) {
    %c0_i32 = arith.constant 0 : i32
    %c0_i32_0 = arith.constant 0 : i32
    %c0_i32_1 = arith.constant 0 : i32
    return %arg0, %c0_i32, %c0_i32_0 : i32, i32, i32
  }
  func.func @transform_3(%arg0: i32, %arg1: i32) -> (i32, i32, i32) {
    %c0_i32 = arith.constant 0 : i32
    %c0_i32_0 = arith.constant 0 : i32
    %c0_i32_1 = arith.constant 0 : i32
    return %arg0, %c0_i32, %c0_i32_0 : i32, i32, i32
  }
  func.func @transform_4(%arg0: i32, %arg1: i32) -> (i32, i32, i32) {
    %c0_i32 = arith.constant 0 : i32
    %c0_i32_0 = arith.constant 0 : i32
    return %arg0, %arg1, %c0_i32 : i32, i32, i32
  }
}

</mosaic_0001>

<llo_original>
// kernel: _lambda_.1
$region0: #{_lambda_.1}
  #allocation0 [shape = 'u32[]', space=smem, size = 0x4, offset = 0x4, fixed_abs, tag = 'smem constant byte address 0x4 - core index']
  #allocation1 [shape = 'u32[144,128]{1,0:T(1,128)}', space=vmem, size = 0x12000, scoped, tag = 'internal scratch']
  %s0 = inlined_call_operand.vmem [shape: f32[16,8,4], index: 0, kind: input, shape index: {}]
  %s1 = inlined_call_operand.vmem [shape: f32[16,4,1024], index: 1, kind: input, shape index: {}]
  %s2 = inlined_call_operand.vmem [shape: f32[16,1024,8], index: 2, kind: input, shape index: {}]
  %s3 = inlined_call_operand.vmem [shape: f32[16,1,1024], index: 3, kind: input, shape index: {}]
  %s4 = inlined_call_operand.vmem [shape: f32[16,8,8], index: 4, kind: output, shape index: {}]
  %s5 = sld [smem:[#allocation0]]
  $region49: #{_lambda_.1} parent=0
    _
  %s7 = ssub.s32 1, %s5
  %s8 = scalar_select 0, %s7, %s5
  loop: start=0, step=1, limit=18
  $region2: #{_lambda_.1} parent=0 // loop_pre_header
    _
  $region3: #{_lambda_.1} parent=0 // loop_header
    %s10 = sphi 0, %s14
    %p11 = scmp.ge.s32.totalorder %s10, 18
    %s17 = sphi 0, %s29
    %s18 = sphi 0, %s25
    %s19 = sphi 0, %s17
    %s20 = sphi 0, %s18
    %s21 = sphi 0, %s19
    %s22 = sphi 0, %s20
    %s34 = sphi 0, %s36
    %s37 = sphi 0, %s34
    %s38 = sphi 0, %s37
    %s54 = sphi 0, %s38
    %s60 = sphi 0, %s62
    %s63 = sphi 0, %s60
    %s64 = sphi 0, %s63
    %s80 = sphi 0, %s64
    %s86 = sphi 0, %s88
    %s89 = sphi 0, %s86
    %s90 = sphi 0, %s89
    %s106 = sphi 0, %s90
    %s112 = sphi 0, %s114
    %s115 = sphi 0, %s112
    %s116 = sphi 0, %s115
    %s132 = sphi 0, %s116
    %s140 = sphi 0, %s142
    %s143 = sphi 0, %s140
    %s144 = sphi 0, %s143
    %s160 = sphi 0, %s144
  $region4: #{_lambda_.1} parent=0 // loop_header_branch
    %13 = sbr.rel (%p11) target = $region8
  $region5: #{_lambda_.1} parent=0 // loop_body
    %s15 = ssub.s32 %s10, 1
    %s16 = ssub.s32 %s10, 2
    %s23 = sadd.s32 1, %s18
    %p24 = scmp.ge.s32.totalorder %s23, 1
    %s25 = scalar_select %p24, 0, %s23
    %s26 = sadd.s32 1, %s17
    %s27 = scalar_select %p24, %s26, %s17
    %p28 = scmp.ge.s32.totalorder %s27, 16
    %s29 = scalar_select %p28, 0, %s27
    %s30 = ssub.s32 %s17, %s29
    %s31 = ssub.s32 %s18, %s25
    %s32 = sor.u32 %s30, %s31
    %p33 = scmp.eq.s32.totalorder %s32, 0
    %s35 = sadd.s32 %s34, 1
    %s36 = scalar_select %p33, %s34, %s35
    %p39 = pneg %p33
    %p40 = scmp.eq.s32.totalorder %s10, 15
    %p41 = por %p39, %p40
    %p42 = scmp.ne.s32.totalorder %s34, %s37
    %p43 = scmp.eq.s32.totalorder %s10, 0
    %p44 = por %p42, %p43
    %p45 = scmp.ne.s32.totalorder %s34, %s37
    %p46 = scmp.eq.s32.totalorder %s15, 15
    %p47 = por %p45, %p46
    %p48 = scmp.ne.s32.totalorder %s37, %s38
    %p49 = scmp.eq.s32.totalorder %s15, 0
    %p50 = por %p48, %p49
    %p51 = scmp.ne.s32.totalorder %s37, %s38
    %p52 = scmp.eq.s32.totalorder %s16, 15
    %p53 = por %p51, %p52
    %p55 = scmp.ne.s32.totalorder %s38, %s54
    %p56 = scmp.eq.s32.totalorder %s16, 0
    %p57 = por %p55, %p56
    %s58 = ssub.s32 %s17, %s29
    %p59 = scmp.eq.s32.totalorder %s58, 0
    %s61 = sadd.s32 %s60, 1
    %s62 = scalar_select %p59, %s60, %s61
    %p65 = pneg %p59
    %p66 = scmp.eq.s32.totalorder %s10, 15
    %p67 = por %p65, %p66
    %p68 = scmp.ne.s32.totalorder %s60, %s63
    %p69 = scmp.eq.s32.totalorder %s10, 0
    %p70 = por %p68, %p69
    %p71 = scmp.ne.s32.totalorder %s60, %s63
    %p72 = scmp.eq.s32.totalorder %s15, 15
    %p73 = por %p71, %p72
    %p74 = scmp.ne.s32.totalorder %s63, %s64
    %p75 = scmp.eq.s32.totalorder %s15, 0
    %p76 = por %p74, %p75
    %p77 = scmp.ne.s32.totalorder %s63, %s64
    %p78 = scmp.eq.s32.totalorder %s16, 15
    %p79 = por %p77, %p78
    %p81 = scmp.ne.s32.totalorder %s64, %s80
    %p82 = scmp.eq.s32.totalorder %s16, 0
    %p83 = por %p81, %p82
    %s84 = ssub.s32 %s17, %s29
    %p85 = scmp.eq.s32.totalorder %s84, 0
    %s87 = sadd.s32 %s86, 1
    %s88 = scalar_select %p85, %s86, %s87
    %p91 = pneg %p85
    %p92 = scmp.eq.s32.totalorder %s10, 15
    %p93 = por %p91, %p92
    %p94 = scmp.ne.s32.totalorder %s86, %s89
    %p95 = scmp.eq.s32.totalorder %s10, 0
    %p96 = por %p94, %p95
    %p97 = scmp.ne.s32.totalorder %s86, %s89
    %p98 = scmp.eq.s32.totalorder %s15, 15
    %p99 = por %p97, %p98
    %p100 = scmp.ne.s32.totalorder %s89, %s90
    %p101 = scmp.eq.s32.totalorder %s15, 0
    %p102 = por %p100, %p101
    %p103 = scmp.ne.s32.totalorder %s89, %s90
    %p104 = scmp.eq.s32.totalorder %s16, 15
    %p105 = por %p103, %p104
    %p107 = scmp.ne.s32.totalorder %s90, %s106
    %p108 = scmp.eq.s32.totalorder %s16, 0
    %p109 = por %p107, %p108
    %s110 = ssub.s32 %s17, %s29
    %p111 = scmp.eq.s32.totalorder %s110, 0
    %s113 = sadd.s32 %s112, 1
    %s114 = scalar_select %p111, %s112, %s113
    %p117 = pneg %p111
    %p118 = scmp.eq.s32.totalorder %s10, 15
    %p119 = por %p117, %p118
    %p120 = scmp.ne.s32.totalorder %s112, %s115
    %p121 = scmp.eq.s32.totalorder %s10, 0
    %p122 = por %p120, %p121
    %p123 = scmp.ne.s32.totalorder %s112, %s115
    %p124 = scmp.eq.s32.totalorder %s15, 15
    %p125 = por %p123, %p124
    %p126 = scmp.ne.s32.totalorder %s115, %s116
    %p127 = scmp.eq.s32.totalorder %s15, 0
    %p128 = por %p126, %p127
    %p129 = scmp.ne.s32.totalorder %s115, %s116
    %p130 = scmp.eq.s32.totalorder %s16, 15
    %p131 = por %p129, %p130
    %p133 = scmp.ne.s32.totalorder %s116, %s132
    %p134 = scmp.eq.s32.totalorder %s16, 0
    %p135 = por %p133, %p134
    %s136 = ssub.s32 %s17, %s29
    %s137 = ssub.s32 %s18, %s25
    %s138 = sor.u32 %s136, %s137
    %p139 = scmp.eq.s32.totalorder %s138, 0
    %s141 = sadd.s32 %s140, 1
    %s142 = scalar_select %p139, %s140, %s141
    %p145 = pneg %p139
    %p146 = scmp.eq.s32.totalorder %s10, 15
    %p147 = por %p145, %p146
    %p148 = scmp.ne.s32.totalorder %s140, %s143
    %p149 = scmp.eq.s32.totalorder %s10, 0
    %p150 = por %p148, %p149
    %p151 = scmp.ne.s32.totalorder %s140, %s143
    %p152 = scmp.eq.s32.totalorder %s15, 15
    %p153 = por %p151, %p152
    %p154 = scmp.ne.s32.totalorder %s143, %s144
    %p155 = scmp.eq.s32.totalorder %s15, 0
    %p156 = por %p154, %p155
    %p157 = scmp.ne.s32.totalorder %s143, %s144
    %p158 = scmp.eq.s32.totalorder %s16, 15
    %p159 = por %p157, %p158
    %p161 = scmp.ne.s32.totalorder %s144, %s160
    %p162 = scmp.eq.s32.totalorder %s16, 0
    %p163 = por %p161, %p162
    %p164 = scmp.le.s32.totalorder 1, %s10
    %p165 = scmp.lt.s32.totalorder %s10, 17
    %p166 = pnand %p164, %p165
    %p167 = pneg %p166
    // Predicated region
    $region9: #{_lambda_.1} parent=5 // pred_check
      _
    $region10: #{_lambda_.1} parent=5 // pred_check_branch
      %169 = sbr.rel (%p166) target = $region12
    $region11: #{_lambda_.1} parent=5 // pred_region
      %s170 = ssub.s32 %s10, 1
    $region12: #{_lambda_.1} parent=5 // pred_fallthru
      _
    %p171 = scmp.lt.s32.totalorder %s10, 16
    // Predicated region
    $region13: #{_lambda_.1} parent=5 // pred_check
      %p172 = pneg %p171
    $region14: #{_lambda_.1} parent=5 // pred_check_branch
      %174 = sbr.rel (%p172) target = $region16
    $region15: #{_lambda_.1} parent=5 // pred_region
      // Predicated region
      $region17: #{_lambda_.1} parent=15 // pred_check
        %p175 = pneg %p44
      $region18: #{_lambda_.1} parent=15 // pred_check_branch
        %177 = sbr.rel (%p175) target = $region20
      $region19: #{_lambda_.1} parent=15 // pred_region
        %p178 = scmp.lt.s32.totalorder %s17, 15
        %s179 = scalar_select %p178, %s17, 15
        %p180 = scmp.lt.s32.totalorder %s18, 0
        %s181 = scalar_select %p180, %s18, 0
        %s182 = sadd.s32 %s181, %s179
        %s183 = smul.addr %s182, 8
        %s184 = scalar_lea.vmem %s0, %s183
      $region20: #{_lambda_.1} parent=15 // pred_fallthru
        _
      // Predicated region
      $region21: #{_lambda_.1} parent=15 // pred_check
        %p185 = pneg %p70
      $region22: #{_lambda_.1} parent=15 // pred_check_branch
        %187 = sbr.rel (%p185) target = $region24
      $region23: #{_lambda_.1} parent=15 // pred_region
        %p188 = scmp.lt.s32.totalorder %s17, 15
        %s189 = scalar_select %p188, %s17, 15
        %s190 = smul.addr %s189, 8
        %s191 = smul.addr %s190, 4
        %s192 = scalar_lea.vmem %s1, %s191
      $region24: #{_lambda_.1} parent=15 // pred_fallthru
        _
      // Predicated region
      $region25: #{_lambda_.1} parent=15 // pred_check
        %p193 = pneg %p96
      $region26: #{_lambda_.1} parent=15 // pred_check_branch
        %195 = sbr.rel (%p193) target = $region28
      $region27: #{_lambda_.1} parent=15 // pred_region
        %p196 = scmp.lt.s32.totalorder %s17, 15
        %s197 = scalar_select %p196, %s17, 15
        %s198 = smul.addr %s197, 128
        %s199 = smul.addr %s198, 8
        %s200 = scalar_lea.vmem %s2, %s199
      $region28: #{_lambda_.1} parent=15 // pred_fallthru
        _
      // Predicated region
      $region29: #{_lambda_.1} parent=15 // pred_check
        %p201 = pneg %p122
      $region30: #{_lambda_.1} parent=15 // pred_check_branch
        %203 = sbr.rel (%p201) target = $region32
      $region31: #{_lambda_.1} parent=15 // pred_region
        %p204 = scmp.lt.s32.totalorder %s17, 15
        %s205 = scalar_select %p204, %s17, 15
        %s206 = smul.addr %s205, 8
        %s207 = scalar_lea.vmem %s3, %s206
      $region32: #{_lambda_.1} parent=15 // pred_fallthru
        _
    $region16: #{_lambda_.1} parent=5 // pred_fallthru
      _
    %p208 = scmp.le.s32.totalorder 1, %s10
    %p209 = scmp.lt.s32.totalorder %s10, 17
    %p210 = pnand %p208, %p209
    %p211 = pneg %p210
    // Predicated region
    $region33: #{_lambda_.1} parent=5 // pred_check
      _
    $region34: #{_lambda_.1} parent=5 // pred_check_branch
      %213 = sbr.rel (%p210) target = $region36
    $region35: #{_lambda_.1} parent=5 // pred_region
      %s214 = ssub.s32 %s10, 1
      %p215 = scmp.lt.s32.totalorder %s19, 15
      %s216 = scalar_select %p215, %s19, 15
      %p217 = scmp.lt.s32.totalorder %s20, 0
      %s218 = scalar_select %p217, %s20, 0
      %s219 = sadd.s32 %s218, %s216
      %s220 = smul.addr %s219, 8
      %s221 = scalar_lea.vmem %s0, %s220
      %p222 = pneg %p50
      %p223 = pneg %p47
      %p224 = scmp.lt.s32.totalorder %s19, 15
      %s225 = scalar_select %p224, %s19, 15
      %s226 = smul.addr %s225, 8
      %s227 = smul.addr %s226, 4
      %s228 = scalar_lea.vmem %s1, %s227
      %p229 = pneg %p76
      %p230 = pneg %p73
      %p231 = scmp.lt.s32.totalorder %s19, 15
      %s232 = scalar_select %p231, %s19, 15
      %s233 = smul.addr %s232, 128
      %s234 = smul.addr %s233, 8
      %s235 = scalar_lea.vmem %s2, %s234
      %p236 = pneg %p102
      %p237 = pneg %p99
      %p238 = scmp.lt.s32.totalorder %s19, 15
      %s239 = scalar_select %p238, %s19, 15
      %s240 = smul.addr %s239, 8
      %s241 = scalar_lea.vmem %s3, %s240
      %p242 = pneg %p128
      %p243 = pneg %p125
      %p244 = pneg %p156
      %p245 = pneg %p153
      %p246 = scmp.lt.s32.totalorder %s19, 15
      %s247 = scalar_select %p246, %s19, 15
      %p248 = scmp.lt.s32.totalorder %s20, 0
      %s249 = scalar_select %p248, %s20, 0
      %s250 = sadd.s32 %s249, %s247
      %s251 = smul.addr %s250, 8
      %s252 = scalar_lea.vmem %s4, %s251
      %p253 = scmp.lt.s32.totalorder %s19, 15
      %s254 = scalar_select %p253, %s19, 15
      %p255 = scmp.lt.s32.totalorder %s20, 0
      %s256 = scalar_select %p255, %s20, 0
      %s257 = sadd.s32 %s256, %s254
      %s258 = smul.addr %s257, 8
      %s259 = scalar_lea.vmem %s0, %s258
      %p260 = scmp.lt.s32.totalorder %s19, 15
      %s261 = scalar_select %p260, %s19, 15
      %s262 = smul.addr %s261, 8
      %s263 = smul.addr %s262, 4
      %s264 = scalar_lea.vmem %s1, %s263
      %p265 = scmp.lt.s32.totalorder %s19, 15
      %s266 = scalar_select %p265, %s19, 15
      %s267 = smul.addr %s266, 128
      %s268 = smul.addr %s267, 8
      %s269 = scalar_lea.vmem %s2, %s268
      %p270 = scmp.lt.s32.totalorder %s19, 15
      %s271 = scalar_select %p270, %s19, 15
      %s272 = smul.addr %s271, 8
      %s273 = scalar_lea.vmem %s3, %s272
      %p274 = scmp.lt.s32.totalorder %s19, 15
      %s275 = scalar_select %p274, %s19, 15
      %p276 = scmp.lt.s32.totalorder %s20, 0
      %s277 = scalar_select %p276, %s20, 0
      %s278 = sadd.s32 %s277, %s275
      %s279 = smul.addr %s278, 8
      %s280 = scalar_lea.vmem %s4, %s279
      %v281 = vld [vmem:[%s259] sm:$0xff]
      %v282 = vld [vmem:[%s264] sm:$0xff]
      %v283 = vld [vmem:[%s264 + $0x8] sm:$0xff]
      %v284 = vld [vmem:[%s264 + $0x10] sm:$0xff]
      %v285 = vld [vmem:[%s264 + $0x18] sm:$0xff]
      %v286 = vld [vmem:[%s273] sm:$0xff]
      %v288 = vlaneseq
      %v289 = vshrl.u32 %v288, 7
      %v290 = vsub.s32 0, %v289
      %v291 = vrot.slane %v286, %v290
      %v292 = vlaneseq
      %v293 = vshrl.u32 %v292, 7
      %v294 = vsub.s32 1, %v293
      %v295 = vrot.slane %v286, %v294
      %v296 = vlaneseq
      %v297 = vshrl.u32 %v296, 7
      %v298 = vsub.s32 2, %v297
      %v299 = vrot.slane %v286, %v298
      %v300 = vlaneseq
      %v301 = vshrl.u32 %v300, 7
      %v302 = vsub.s32 3, %v301
      %v303 = vrot.slane %v286, %v302
      %v304 = vlaneseq
      %v305 = vshrl.u32 %v304, 7
      %v306 = vsub.s32 4, %v305
      %v307 = vrot.slane %v286, %v306
      %v308 = vlaneseq
      %v309 = vshrl.u32 %v308, 7
      %v310 = vsub.s32 5, %v309
      %v311 = vrot.slane %v286, %v310
      %v312 = vlaneseq
      %v313 = vshrl.u32 %v312, 7
      %v314 = vsub.s32 6, %v313
      %v315 = vrot.slane %v286, %v314
      %v316 = vlaneseq
      %v317 = vshrl.u32 %v316, 7
      %v318 = vsub.s32 7, %v317
      %v319 = vrot.slane %v286, %v318
      %v332 = vcombine.high %v282, %v282
      %v333 = vcombine.high %v283, %v283
      %v334 = vcombine.high %v284, %v284
      %v335 = vcombine.high %v285, %v285
      %vm336 = vcmask 31744
      %v338 = vsel %vm336, %v281, 0
      %vm340 = vcmask 1043456
      %v341 = vsel %vm340, %v282, 0
      %v343 = vsel %vm340, %v332, 0
      %v345 = vsel %vm340, %v283, 0
      %v347 = vsel %vm340, %v333, 0
      %v349 = vsel %vm340, %v284, 0
      %v351 = vsel %vm340, %v334, 0
      %v353 = vsel %vm340, %v285, 0
      %v355 = vsel %vm340, %v335, 0
      %357 = vmatprep.subr.mxu0 0.0
      %358 = vmatpush1.msra.mxu0 0.0
      %359 = vmatprep.subr.mxu0 0.0
      %360 = vmatpush1.msra.mxu0 0.0
      %361 = vmatprep.subr.mxu0 0.0
      %362 = vmatpush1.msra.mxu0 0.0
      %363 = vmatprep.subr.mxu0 0.0
      %364 = vmatpush1.msra.mxu0 0.0
      %365 = vmatprep.subr.mxu0 0.0
      %366 = vmatpush1.msra.mxu0 0.0
      %367 = vmatprep.subr.mxu0 0.0
      %368 = vmatpush1.msra.mxu0 0.0
      %369 = vmatprep.subr.mxu0 0.0
      %370 = vmatpush1.msra.mxu0 0.0
      %371 = vmatprep.subr.mxu0 0.0
      %372 = vmatpush1.msra.mxu0 0.0
      %373 = vmatprep.subr.mxu0 0.0
      %374 = vmatpush1.msra.mxu0 0.0
      %375 = vmatprep.subr.mxu0 0.0
      %376 = vmatpush1.msra.mxu0 0.0
      %377 = vmatprep.subr.mxu0 0.0
      %378 = vmatpush1.msra.mxu0 0.0
      %379 = vmatprep.subr.mxu0 0.0
      %380 = vmatpush1.msra.mxu0 0.0
      %381 = vmatprep.subr.mxu0 0.0
      %382 = vmatpush1.msra.mxu0 0.0
      %383 = vmatprep.subr.mxu0 0.0
      %384 = vmatpush1.msra.mxu0 0.0
      %385 = vmatprep.subr.mxu0 0.0
      %386 = vmatpush1.msra.mxu0 0.0
      %387 = vmatprep.subr.mxu0 %v343
      %388 = vmatpush1.msra.mxu0 %v341
      %389 = vmatprep.subr.mxu0 0.0
      %390 = vmatpush2.msra.mxu0 0.0
      %391 = vmatprep.subr.mxu0 0.0
      %392 = vmatpush2.msra.mxu0 0.0
      %393 = vmatprep.subr.mxu0 0.0
      %394 = vmatpush2.msra.mxu0 0.0
      %395 = vmatprep.subr.mxu0 0.0
      %396 = vmatpush2.msra.mxu0 0.0
      %397 = vmatprep.subr.mxu0 0.0
      %398 = vmatpush2.msra.mxu0 0.0
      %399 = vmatprep.subr.mxu0 0.0
      %400 = vmatpush2.msra.mxu0 0.0
      %401 = vmatprep.subr.mxu0 0.0
      %402 = vmatpush2.msra.mxu0 0.0
      %403 = vmatprep.subr.mxu0 0.0
      %404 = vmatpush2.msra.mxu0 0.0
      %405 = vmatprep.subr.mxu0 0.0
      %406 = vmatpush2.msra.mxu0 0.0
      %407 = vmatprep.subr.mxu0 0.0
      %408 = vmatpush2.msra.mxu0 0.0
      %409 = vmatprep.subr.mxu0 0.0
      %410 = vmatpush2.msra.mxu0 0.0
      %411 = vmatprep.subr.mxu0 0.0
      %412 = vmatpush2.msra.mxu0 0.0
      %413 = vmatprep.subr.mxu0 0.0
      %414 = vmatpush2.msra.mxu0 0.0
      %415 = vmatprep.subr.mxu0 0.0
      %416 = vmatpush2.msra.mxu0 0.0
      %417 = vmatprep.subr.mxu0 0.0
      %418 = vmatpush2.msra.mxu0 0.0
      %419 = vmatprep.subr.mxu0 0.0
      %420 = vmatpush2.msra.mxu0 0.0
      %421 = vmatprep.mubr.f32.mxu0 0.0
      %422 = vmatmul.mubr.f32.gmra.mxu0 %v338
      %v423 = vpop.f32.mrf.mxu0
      %v424 = vadd.f32 %v291, %v423
      %v425 = vpop.f32.mrf.mxu0
      %v426 = vadd.f32 %v295, %v425
      %427 = vdwg.mxu0
      %428 = vmatprep.subr.mxu0 0.0
      %429 = vmatpush1.msra.mxu0 0.0
      %430 = vmatprep.subr.mxu0 0.0
      %431 = vmatpush1.msra.mxu0 0.0
      %432 = vmatprep.subr.mxu0 0.0
      %433 = vmatpush1.msra.mxu0 0.0
      %434 = vmatprep.subr.mxu0 0.0
      %435 = vmatpush1.msra.mxu0 0.0
      %436 = vmatprep.subr.mxu0 0.0
      %437 = vmatpush1.msra.mxu0 0.0
      %438 = vmatprep.subr.mxu0 0.0
      %439 = vmatpush1.msra.mxu0 0.0
      %440 = vmatprep.subr.mxu0 0.0
      %441 = vmatpush1.msra.mxu0 0.0
      %442 = vmatprep.subr.mxu0 0.0
      %443 = vmatpush1.msra.mxu0 0.0
      %444 = vmatprep.subr.mxu0 0.0
      %445 = vmatpush1.msra.mxu0 0.0
      %446 = vmatprep.subr.mxu0 0.0
      %447 = vmatpush1.msra.mxu0 0.0
      %448 = vmatprep.subr.mxu0 0.0
      %449 = vmatpush1.msra.mxu0 0.0
      %450 = vmatprep.subr.mxu0 0.0
      %451 = vmatpush1.msra.mxu0 0.0
      %452 = vmatprep.subr.mxu0 0.0
      %453 = vmatpush1.msra.mxu0 0.0
      %454 = vmatprep.subr.mxu0 0.0
      %455 = vmatpush1.msra.mxu0 0.0
      %456 = vmatprep.subr.mxu0 0.0
      %457 = vmatpush1.msra.mxu0 0.0
      %458 = vmatprep.subr.mxu0 %v347
      %459 = vmatpush1.msra.mxu0 %v345
      %460 = vmatprep.subr.mxu0 0.0
      %461 = vmatpush2.msra.mxu0 0.0
      %462 = vmatprep.subr.mxu0 0.0
      %463 = vmatpush2.msra.mxu0 0.0
      %464 = vmatprep.subr.mxu0 0.0
      %465 = vmatpush2.msra.mxu0 0.0
      %466 = vmatprep.subr.mxu0 0.0
      %467 = vmatpush2.msra.mxu0 0.0
      %468 = vmatprep.subr.mxu0 0.0
      %469 = vmatpush2.msra.mxu0 0.0
      %470 = vmatprep.subr.mxu0 0.0
      %471 = vmatpush2.msra.mxu0 0.0
      %472 = vmatprep.subr.mxu0 0.0
      %473 = vmatpush2.msra.mxu0 0.0
      %474 = vmatprep.subr.mxu0 0.0
      %475 = vmatpush2.msra.mxu0 0.0
      %476 = vmatprep.subr.mxu0 0.0
      %477 = vmatpush2.msra.mxu0 0.0
      %478 = vmatprep.subr.mxu0 0.0
      %479 = vmatpush2.msra.mxu0 0.0
      %480 = vmatprep.subr.mxu0 0.0
      %481 = vmatpush2.msra.mxu0 0.0
      %482 = vmatprep.subr.mxu0 0.0
      %483 = vmatpush2.msra.mxu0 0.0
      %484 = vmatprep.subr.mxu0 0.0
      %485 = vmatpush2.msra.mxu0 0.0
      %486 = vmatprep.subr.mxu0 0.0
      %487 = vmatpush2.msra.mxu0 0.0
      %488 = vmatprep.subr.mxu0 0.0
      %489 = vmatpush2.msra.mxu0 0.0
      %490 = vmatprep.subr.mxu0 0.0
      %491 = vmatpush2.msra.mxu0 0.0
      %492 = vmatprep.mubr.f32.mxu0 0.0
      %493 = vmatmul.mubr.f32.gmra.mxu0 %v338
      %v494 = vpop.f32.mrf.mxu0
      %v495 = vadd.f32 %v299, %v494
      %v496 = vpop.f32.mrf.mxu0
      %v497 = vadd.f32 %v303, %v496
      %498 = vdwg.mxu0
      %499 = vmatprep.subr.mxu0 0.0
      %500 = vmatpush1.msra.mxu0 0.0
      %501 = vmatprep.subr.mxu0 0.0
      %502 = vmatpush1.msra.mxu0 0.0
      %503 = vmatprep.subr.mxu0 0.0
      %504 = vmatpush1.msra.mxu0 0.0
      %505 = vmatprep.subr.mxu0 0.0
      %506 = vmatpush1.msra.mxu0 0.0
      %507 = vmatprep.subr.mxu0 0.0
      %508 = vmatpush1.msra.mxu0 0.0
      %509 = vmatprep.subr.mxu0 0.0
      %510 = vmatpush1.msra.mxu0 0.0
      %511 = vmatprep.subr.mxu0 0.0
      %512 = vmatpush1.msra.mxu0 0.0
      %513 = vmatprep.subr.mxu0 0.0
      %514 = vmatpush1.msra.mxu0 0.0
      %515 = vmatprep.subr.mxu0 0.0
      %516 = vmatpush1.msra.mxu0 0.0
      %517 = vmatprep.subr.mxu0 0.0
      %518 = vmatpush1.msra.mxu0 0.0
      %519 = vmatprep.subr.mxu0 0.0
      %520 = vmatpush1.msra.mxu0 0.0
      %521 = vmatprep.subr.mxu0 0.0
      %522 = vmatpush1.msra.mxu0 0.0
      %523 = vmatprep.subr.mxu0 0.0
      %524 = vmatpush1.msra.mxu0 0.0
      %525 = vmatprep.subr.mxu0 0.0
      %526 = vmatpush1.msra.mxu0 0.0
      %527 = vmatprep.subr.mxu0 0.0
      %528 = vmatpush1.msra.mxu0 0.0
      %529 = vmatprep.subr.mxu0 %v351
      %530 = vmatpush1.msra.mxu0 %v349
      %531 = vmatprep.subr.mxu0 0.0
      %532 = vmatpush2.msra.mxu0 0.0
      %533 = vmatprep.subr.mxu0 0.0
      %534 = vmatpush2.msra.mxu0 0.0
      %535 = vmatprep.subr.mxu0 0.0
      %536 = vmatpush2.msra.mxu0 0.0
      %537 = vmatprep.subr.mxu0 0.0
      %538 = vmatpush2.msra.mxu0 0.0
      %539 = vmatprep.subr.mxu0 0.0
      %540 = vmatpush2.msra.mxu0 0.0
      %541 = vmatprep.subr.mxu0 0.0
      %542 = vmatpush2.msra.mxu0 0.0
      %543 = vmatprep.subr.mxu0 0.0
      %544 = vmatpush2.msra.mxu0 0.0
      %545 = vmatprep.subr.mxu0 0.0
      %546 = vmatpush2.msra.mxu0 0.0
      %547 = vmatprep.subr.mxu0 0.0
      %548 = vmatpush2.msra.mxu0 0.0
      %549 = vmatprep.subr.mxu0 0.0
      %550 = vmatpush2.msra.mxu0 0.0
      %551 = vmatprep.subr.mxu0 0.0
      %552 = vmatpush2.msra.mxu0 0.0
      %553 = vmatprep.subr.mxu0 0.0
      %554 = vmatpush2.msra.mxu0 0.0
      %555 = vmatprep.subr.mxu0 0.0
      %556 = vmatpush2.msra.mxu0 0.0
      %557 = vmatprep.subr.mxu0 0.0
      %558 = vmatpush2.msra.mxu0 0.0
      %559 = vmatprep.subr.mxu0 0.0
      %560 = vmatpush2.msra.mxu0 0.0
      %561 = vmatprep.subr.mxu0 0.0
      %562 = vmatpush2.msra.mxu0 0.0
      %563 = vmatprep.mubr.f32.mxu0 0.0
      %564 = vmatmul.mubr.f32.gmra.mxu0 %v338
      %v565 = vpop.f32.mrf.mxu0
      %v566 = vadd.f32 %v307, %v565
      %v567 = vpop.f32.mrf.mxu0
      %v568 = vadd.f32 %v311, %v567
      %569 = vdwg.mxu0
      %570 = vmatprep.subr.mxu0 0.0
      %571 = vmatpush1.msra.mxu0 0.0
      %572 = vmatprep.subr.mxu0 0.0
      %573 = vmatpush1.msra.mxu0 0.0
      %574 = vmatprep.subr.mxu0 0.0
      %575 = vmatpush1.msra.mxu0 0.0
      %576 = vmatprep.subr.mxu0 0.0
      %577 = vmatpush1.msra.mxu0 0.0
      %578 = vmatprep.subr.mxu0 0.0
      %579 = vmatpush1.msra.mxu0 0.0
      %580 = vmatprep.subr.mxu0 0.0
      %581 = vmatpush1.msra.mxu0 0.0
      %582 = vmatprep.subr.mxu0 0.0
      %583 = vmatpush1.msra.mxu0 0.0
      %584 = vmatprep.subr.mxu0 0.0
      %585 = vmatpush1.msra.mxu0 0.0
      %586 = vmatprep.subr.mxu0 0.0
      %587 = vmatpush1.msra.mxu0 0.0
      %588 = vmatprep.subr.mxu0 0.0
      %589 = vmatpush1.msra.mxu0 0.0
      %590 = vmatprep.subr.mxu0 0.0
      %591 = vmatpush1.msra.mxu0 0.0
      %592 = vmatprep.subr.mxu0 0.0
      %593 = vmatpush1.msra.mxu0 0.0
      %594 = vmatprep.subr.mxu0 0.0
      %595 = vmatpush1.msra.mxu0 0.0
      %596 = vmatprep.subr.mxu0 0.0
      %597 = vmatpush1.msra.mxu0 0.0
      %598 = vmatprep.subr.mxu0 0.0
      %599 = vmatpush1.msra.mxu0 0.0
      %600 = vmatprep.subr.mxu0 %v355
      %601 = vmatpush1.msra.mxu0 %v353
      %602 = vmatprep.subr.mxu0 0.0
      %603 = vmatpush2.msra.mxu0 0.0
      %604 = vmatprep.subr.mxu0 0.0
      %605 = vmatpush2.msra.mxu0 0.0
      %606 = vmatprep.subr.mxu0 0.0
      %607 = vmatpush2.msra.mxu0 0.0
      %608 = vmatprep.subr.mxu0 0.0
      %609 = vmatpush2.msra.mxu0 0.0
      %610 = vmatprep.subr.mxu0 0.0
      %611 = vmatpush2.msra.mxu0 0.0
      %612 = vmatprep.subr.mxu0 0.0
      %613 = vmatpush2.msra.mxu0 0.0
      %614 = vmatprep.subr.mxu0 0.0
      %615 = vmatpush2.msra.mxu0 0.0
      %616 = vmatprep.subr.mxu0 0.0
      %617 = vmatpush2.msra.mxu0 0.0
      %618 = vmatprep.subr.mxu0 0.0
      %619 = vmatpush2.msra.mxu0 0.0
      %620 = vmatprep.subr.mxu0 0.0
      %621 = vmatpush2.msra.mxu0 0.0
      %622 = vmatprep.subr.mxu0 0.0
      %623 = vmatpush2.msra.mxu0 0.0
      %624 = vmatprep.subr.mxu0 0.0
      %625 = vmatpush2.msra.mxu0 0.0
      %626 = vmatprep.subr.mxu0 0.0
      %627 = vmatpush2.msra.mxu0 0.0
      %628 = vmatprep.subr.mxu0 0.0
      %629 = vmatpush2.msra.mxu0 0.0
      %630 = vmatprep.subr.mxu0 0.0
      %631 = vmatpush2.msra.mxu0 0.0
      %632 = vmatprep.subr.mxu0 0.0
      %633 = vmatpush2.msra.mxu0 0.0
      %634 = vmatprep.mubr.f32.mxu0 0.0
      %635 = vmatmul.mubr.f32.gmra.mxu0 %v338
      %v636 = vpop.f32.mrf.mxu0
      %v637 = vadd.f32 %v315, %v636
      %v638 = vpop.f32.mrf.mxu0
      %v639 = vadd.f32 %v319, %v638
      %640 = vdwg.mxu0
      %v641 = vmin.f32 %v424, %v566
      %v642 = vmin.f32 %v426, %v568
      %v643 = vmin.f32 %v495, %v637
      %v644 = vmin.f32 %v497, %v639
      %v645 = vmin.f32 %v641, %v642
      %v646 = vmin.f32 %v643, %v644
      %v647 = vmin.f32 %v645, %v646
      %648 = vmin.xlane.f32.xlu0 %v647
      %v649 = vpop.xlane.xlu0 %648
      %v650 = vlaneseq
      %v651 = vand.u32 %v650, 127
      %v652 = vadd.s32 %v651, 128
      %v653 = vadd.s32 %v651, 256
      %v654 = vadd.s32 %v651, 384
      %v655 = vadd.s32 %v651, 512
      %v656 = vadd.s32 %v651, 640
      %v657 = vadd.s32 %v651, 768
      %v658 = vadd.s32 %v651, 896
      %v659 = vcvt.s32.f32 %v651
      %v660 = vcvt.s32.f32 %v652
      %v661 = vcvt.s32.f32 %v653
      %v662 = vcvt.s32.f32 %v654
      %v663 = vcvt.s32.f32 %v655
      %v664 = vcvt.s32.f32 %v656
      %v665 = vcvt.s32.f32 %v657
      %v666 = vcvt.s32.f32 %v658
      %vm667 = vcmp.eq.f32.partialorder %v424, %v649
      %vm668 = vcmp.eq.f32.partialorder %v426, %v649
      %vm669 = vcmp.eq.f32.partialorder %v495, %v649
      %vm670 = vcmp.eq.f32.partialorder %v497, %v649
      %vm671 = vcmp.eq.f32.partialorder %v566, %v649
      %vm672 = vcmp.eq.f32.partialorder %v568, %v649
      %vm673 = vcmp.eq.f32.partialorder %v637, %v649
      %vm674 = vcmp.eq.f32.partialorder %v639, %v649
      %v675 = vsel %vm667, %v659, 1024.0
      %v676 = vsel %vm668, %v660, 1024.0
      %v677 = vsel %vm669, %v661, 1024.0
      %v678 = vsel %vm670, %v662, 1024.0
      %v679 = vsel %vm671, %v663, 1024.0
      %v680 = vsel %vm672, %v664, 1024.0
      %v681 = vsel %vm673, %v665, 1024.0
      %v682 = vsel %vm674, %v666, 1024.0
      %v683 = vmin.f32 %v675, %v679
      %v684 = vmin.f32 %v676, %v680
      %v685 = vmin.f32 %v677, %v681
      %v686 = vmin.f32 %v678, %v682
      %v687 = vmin.f32 %v683, %v684
      %v688 = vmin.f32 %v685, %v686
      %v689 = vmin.f32 %v687, %v688
      %690 = vmin.xlane.f32.xlu0 %v689
      %v691 = vpop.xlane.xlu0 %690
      %vm692 = vcmp.eq.f32.partialorder %v659, %v691
      %vm693 = vcmp.eq.f32.partialorder %v660, %v691
      %vm694 = vcmp.eq.f32.partialorder %v661, %v691
      %vm695 = vcmp.eq.f32.partialorder %v662, %v691
      %vm696 = vcmp.eq.f32.partialorder %v663, %v691
      %vm697 = vcmp.eq.f32.partialorder %v664, %v691
      %vm698 = vcmp.eq.f32.partialorder %v665, %v691
      %vm699 = vcmp.eq.f32.partialorder %v666, %v691
      %v700 = vsel %vm692, 1, 0
      %v701 = vsel %vm693, 1, 0
      %v702 = vsel %vm694, 1, 0
      %v703 = vsel %vm695, 1, 0
      %v704 = vsel %vm696, 1, 0
      %v705 = vsel %vm697, 1, 0
      %v706 = vsel %vm698, 1, 0
      %v707 = vsel %vm699, 1, 0
      %v708 = vcvt.s32.f32 %v700
      %v709 = vcvt.s32.f32 %v701
      %v710 = vcvt.s32.f32 %v702
      %v711 = vcvt.s32.f32 %v703
      %v712 = vcvt.s32.f32 %v704
      %v713 = vcvt.s32.f32 %v705
      %v714 = vcvt.s32.f32 %v706
      %v715 = vcvt.s32.f32 %v707
      %v716 = vld [vmem:[%s269] sm:$0xff]
      %v717 = vld [vmem:[%s269 + $0x8] sm:$0xff]
      %v718 = vld [vmem:[%s269 + $0x10] sm:$0xff]
      %v719 = vld [vmem:[%s269 + $0x18] sm:$0xff]
      %v720 = vld [vmem:[%s269 + $0x20] sm:$0xff]
      %v721 = vld [vmem:[%s269 + $0x28] sm:$0xff]
      %v722 = vld [vmem:[%s269 + $0x30] sm:$0xff]
      %v723 = vld [vmem:[%s269 + $0x38] sm:$0xff]
      %v724 = vld [vmem:[%s269 + $0x40] sm:$0xff]
      %v725 = vld [vmem:[%s269 + $0x48] sm:$0xff]
      %v726 = vld [vmem:[%s269 + $0x50] sm:$0xff]
      %v727 = vld [vmem:[%s269 + $0x58] sm:$0xff]
      %v728 = vld [vmem:[%s269 + $0x60] sm:$0xff]
      %v729 = vld [vmem:[%s269 + $0x68] sm:$0xff]
      %v730 = vld [vmem:[%s269 + $0x70] sm:$0xff]
      %v731 = vld [vmem:[%s269 + $0x78] sm:$0xff]
      %v732 = vld [vmem:[%s269 + $0x80] sm:$0xff]
      %v733 = vld [vmem:[%s269 + $0x88] sm:$0xff]
      %v734 = vld [vmem:[%s269 + $0x90] sm:$0xff]
      %v735 = vld [vmem:[%s269 + $0x98] sm:$0xff]
      %v736 = vld [vmem:[%s269 + $0xa0] sm:$0xff]
      %v737 = vld [vmem:[%s269 + $0xa8] sm:$0xff]
      %v738 = vld [vmem:[%s269 + $0xb0] sm:$0xff]
      %v739 = vld [vmem:[%s269 + $0xb8] sm:$0xff]
      %v740 = vld [vmem:[%s269 + $0xc0] sm:$0xff]
      %v741 = vld [vmem:[%s269 + $0xc8] sm:$0xff]
      %v742 = vld [vmem:[%s269 + $0xd0] sm:$0xff]
      %v743 = vld [vmem:[%s269 + $0xd8] sm:$0xff]
      %v744 = vld [vmem:[%s269 + $0xe0] sm:$0xff]
      %v745 = vld [vmem:[%s269 + $0xe8] sm:$0xff]
      %v746 = vld [vmem:[%s269 + $0xf0] sm:$0xff]
      %v747 = vld [vmem:[%s269 + $0xf8] sm:$0xff]
      %v748 = vld [vmem:[%s269 + $0x100] sm:$0xff]
      %v749 = vld [vmem:[%s269 + $0x108] sm:$0xff]
      %v750 = vld [vmem:[%s269 + $0x110] sm:$0xff]
      %v751 = vld [vmem:[%s269 + $0x118] sm:$0xff]
      %v752 = vld [vmem:[%s269 + $0x120] sm:$0xff]
      %v753 = vld [vmem:[%s269 + $0x128] sm:$0xff]
      %v754 = vld [vmem:[%s269 + $0x130] sm:$0xff]
      %v755 = vld [vmem:[%s269 + $0x138] sm:$0xff]
      %v756 = vld [vmem:[%s269 + $0x140] sm:$0xff]
      %v757 = vld [vmem:[%s269 + $0x148] sm:$0xff]
      %v758 = vld [vmem:[%s269 + $0x150] sm:$0xff]
      %v759 = vld [vmem:[%s269 + $0x158] sm:$0xff]
      %v760 = vld [vmem:[%s269 + $0x160] sm:$0xff]
      %v761 = vld [vmem:[%s269 + $0x168] sm:$0xff]
      %v762 = vld [vmem:[%s269 + $0x170] sm:$0xff]
      %v763 = vld [vmem:[%s269 + $0x178] sm:$0xff]
      %v764 = vld [vmem:[%s269 + $0x180] sm:$0xff]
      %v765 = vld [vmem:[%s269 + $0x188] sm:$0xff]
      %v766 = vld [vmem:[%s269 + $0x190] sm:$0xff]
      %v767 = vld [vmem:[%s269 + $0x198] sm:$0xff]
      %v768 = vld [vmem:[%s269 + $0x1a0] sm:$0xff]
      %v769 = vld [vmem:[%s269 + $0x1a8] sm:$0xff]
      %v770 = vld [vmem:[%s269 + $0x1b0] sm:$0xff]
      %v771 = vld [vmem:[%s269 + $0x1b8] sm:$0xff]
      %v772 = vld [vmem:[%s269 + $0x1c0] sm:$0xff]
      %v773 = vld [vmem:[%s269 + $0x1c8] sm:$0xff]
      %v774 = vld [vmem:[%s269 + $0x1d0] sm:$0xff]
      %v775 = vld [vmem:[%s269 + $0x1d8] sm:$0xff]
      %v776 = vld [vmem:[%s269 + $0x1e0] sm:$0xff]
      %v777 = vld [vmem:[%s269 + $0x1e8] sm:$0xff]
      %v778 = vld [vmem:[%s269 + $0x1f0] sm:$0xff]
      %v779 = vld [vmem:[%s269 + $0x1f8] sm:$0xff]
      %v780 = vld [vmem:[%s269 + $0x200] sm:$0xff]
      %v781 = vld [vmem:[%s269 + $0x208] sm:$0xff]
      %v782 = vld [vmem:[%s269 + $0x210] sm:$0xff]
      %v783 = vld [vmem:[%s269 + $0x218] sm:$0xff]
      %v784 = vld [vmem:[%s269 + $0x220] sm:$0xff]
      %v785 = vld [vmem:[%s269 + $0x228] sm:$0xff]
      %v786 = vld [vmem:[%s269 + $0x230] sm:$0xff]
      %v787 = vld [vmem:[%s269 + $0x238] sm:$0xff]
      %v788 = vld [vmem:[%s269 + $0x240] sm:$0xff]
      %v789 = vld [vmem:[%s269 + $0x248] sm:$0xff]
      %v790 = vld [vmem:[%s269 + $0x250] sm:$0xff]
      %v791 = vld [vmem:[%s269 + $0x258] sm:$0xff]
      %v792 = vld [vmem:[%s269 + $0x260] sm:$0xff]
      %v793 = vld [vmem:[%s269 + $0x268] sm:$0xff]
      %v794 = vld [vmem:[%s269 + $0x270] sm:$0xff]
      %v795 = vld [vmem:[%s269 + $0x278] sm:$0xff]
      %v796 = vld [vmem:[%s269 + $0x280] sm:$0xff]
      %v797 = vld [vmem:[%s269 + $0x288] sm:$0xff]
      %v798 = vld [vmem:[%s269 + $0x290] sm:$0xff]
      %v799 = vld [vmem:[%s269 + $0x298] sm:$0xff]
      %v800 = vld [vmem:[%s269 + $0x2a0] sm:$0xff]
      %v801 = vld [vmem:[%s269 + $0x2a8] sm:$0xff]
      %v802 = vld [vmem:[%s269 + $0x2b0] sm:$0xff]
      %v803 = vld [vmem:[%s269 + $0x2b8] sm:$0xff]
      %v804 = vld [vmem:[%s269 + $0x2c0] sm:$0xff]
      %v805 = vld [vmem:[%s269 + $0x2c8] sm:$0xff]
      %v806 = vld [vmem:[%s269 + $0x2d0] sm:$0xff]
      %v807 = vld [vmem:[%s269 + $0x2d8] sm:$0xff]
      %v808 = vld [vmem:[%s269 + $0x2e0] sm:$0xff]
      %v809 = vld [vmem:[%s269 + $0x2e8] sm:$0xff]
      %v810 = vld [vmem:[%s269 + $0x2f0] sm:$0xff]
      %v811 = vld [vmem:[%s269 + $0x2f8] sm:$0xff]
      %v812 = vld [vmem:[%s269 + $0x300] sm:$0xff]
      %v813 = vld [vmem:[%s269 + $0x308] sm:$0xff]
      %v814 = vld [vmem:[%s269 + $0x310] sm:$0xff]
      %v815 = vld [vmem:[%s269 + $0x318] sm:$0xff]
      %v816 = vld [vmem:[%s269 + $0x320] sm:$0xff]
      %v817 = vld [vmem:[%s269 + $0x328] sm:$0xff]
      %v818 = vld [vmem:[%s269 + $0x330] sm:$0xff]
      %v819 = vld [vmem:[%s269 + $0x338] sm:$0xff]
      %v820 = vld [vmem:[%s269 + $0x340] sm:$0xff]
      %v821 = vld [vmem:[%s269 + $0x348] sm:$0xff]
      %v822 = vld [vmem:[%s269 + $0x350] sm:$0xff]
      %v823 = vld [vmem:[%s269 + $0x358] sm:$0xff]
      %v824 = vld [vmem:[%s269 + $0x360] sm:$0xff]
      %v825 = vld [vmem:[%s269 + $0x368] sm:$0xff]
      %v826 = vld [vmem:[%s269 + $0x370] sm:$0xff]
      %v827 = vld [vmem:[%s269 + $0x378] sm:$0xff]
      %v828 = vld [vmem:[%s269 + $0x380] sm:$0xff]
      %v829 = vld [vmem:[%s269 + $0x388] sm:$0xff]
      %v830 = vld [vmem:[%s269 + $0x390] sm:$0xff]
      %v831 = vld [vmem:[%s269 + $0x398] sm:$0xff]
      %v832 = vld [vmem:[%s269 + $0x3a0] sm:$0xff]
      %v833 = vld [vmem:[%s269 + $0x3a8] sm:$0xff]
      %v834 = vld [vmem:[%s269 + $0x3b0] sm:$0xff]
      %v835 = vld [vmem:[%s269 + $0x3b8] sm:$0xff]
      %v836 = vld [vmem:[%s269 + $0x3c0] sm:$0xff]
      %v837 = vld [vmem:[%s269 + $0x3c8] sm:$0xff]
      %v838 = vld [vmem:[%s269 + $0x3d0] sm:$0xff]
      %v839 = vld [vmem:[%s269 + $0x3d8] sm:$0xff]
      %v840 = vld [vmem:[%s269 + $0x3e0] sm:$0xff]
      %v841 = vld [vmem:[%s269 + $0x3e8] sm:$0xff]
      %v842 = vld [vmem:[%s269 + $0x3f0] sm:$0xff]
      %v843 = vld [vmem:[%s269 + $0x3f8] sm:$0xff]
      %844 = vmatprep.subr.mxu0 0.0
      %845 = vmatpush1.msra.mxu0 %v731
      %846 = vmatprep.subr.mxu0 0.0
      %847 = vmatpush1.msra.mxu0 %v730
      %848 = vmatprep.subr.mxu0 0.0
      %849 = vmatpush1.msra.mxu0 %v729
      %850 = vmatprep.subr.mxu0 0.0
      %851 = vmatpush1.msra.mxu0 %v728
      %852 = vmatprep.subr.mxu0 0.0
      %853 = vmatpush1.msra.mxu0 %v727
      %854 = vmatprep.subr.mxu0 0.0
      %855 = vmatpush1.msra.mxu0 %v726
      %856 = vmatprep.subr.mxu0 0.0
      %857 = vmatpush1.msra.mxu0 %v725
      %858 = vmatprep.subr.mxu0 0.0
      %859 = vmatpush1.msra.mxu0 %v724
      %860 = vmatprep.subr.mxu0 0.0
      %861 = vmatpush1.msra.mxu0 %v723
      %862 = vmatprep.subr.mxu0 0.0
      %863 = vmatpush1.msra.mxu0 %v722
      %864 = vmatprep.subr.mxu0 0.0
      %865 = vmatpush1.msra.mxu0 %v721
      %866 = vmatprep.subr.mxu0 0.0
      %867 = vmatpush1.msra.mxu0 %v720
      %868 = vmatprep.subr.mxu0 0.0
      %869 = vmatpush1.msra.mxu0 %v719
      %870 = vmatprep.subr.mxu0 0.0
      %871 = vmatpush1.msra.mxu0 %v718
      %872 = vmatprep.subr.mxu0 0.0
      %873 = vmatpush1.msra.mxu0 %v717
      %874 = vmatprep.subr.mxu0 0.0
      %875 = vmatpush1.msra.mxu0 %v716
      %876 = vmatprep.subr.mxu0 0.0
      %877 = vmatpush2.msra.mxu0 %v747
      %878 = vmatprep.subr.mxu0 0.0
      %879 = vmatpush2.msra.mxu0 %v746
      %880 = vmatprep.subr.mxu0 0.0
      %881 = vmatpush2.msra.mxu0 %v745
      %882 = vmatprep.subr.mxu0 0.0
      %883 = vmatpush2.msra.mxu0 %v744
      %884 = vmatprep.subr.mxu0 0.0
      %885 = vmatpush2.msra.mxu0 %v743
      %886 = vmatprep.subr.mxu0 0.0
      %887 = vmatpush2.msra.mxu0 %v742
      %888 = vmatprep.subr.mxu0 0.0
      %889 = vmatpush2.msra.mxu0 %v741
      %890 = vmatprep.subr.mxu0 0.0
      %891 = vmatpush2.msra.mxu0 %v740
      %892 = vmatprep.subr.mxu0 0.0
      %893 = vmatpush2.msra.mxu0 %v739
      %894 = vmatprep.subr.mxu0 0.0
      %895 = vmatpush2.msra.mxu0 %v738
      %896 = vmatprep.subr.mxu0 0.0
      %897 = vmatpush2.msra.mxu0 %v737
      %898 = vmatprep.subr.mxu0 0.0
      %899 = vmatpush2.msra.mxu0 %v736
      %900 = vmatprep.subr.mxu0 0.0
      %901 = vmatpush2.msra.mxu0 %v735
      %902 = vmatprep.subr.mxu0 0.0
      %903 = vmatpush2.msra.mxu0 %v734
      %904 = vmatprep.subr.mxu0 0.0
      %905 = vmatpush2.msra.mxu0 %v733
      %906 = vmatprep.subr.mxu0 0.0
      %907 = vmatpush2.msra.mxu0 %v732
      %908 = vmatprep.mubr.f32.mxu0 %v709
      %909 = vmatmul.mubr.f32.gmra.mxu0 %v708
      %v910 = vpop.f32.mrf.mxu0
      %v911 = vadd.f32 0.0, %v910
      %v912 = vpop.f32.mrf.mxu0
      %913 = vdwg.mxu0
      %914 = vmatprep.subr.mxu0 0.0
      %915 = vmatpush1.msra.mxu0 %v763
      %916 = vmatprep.subr.mxu0 0.0
      %917 = vmatpush1.msra.mxu0 %v762
      %918 = vmatprep.subr.mxu0 0.0
      %919 = vmatpush1.msra.mxu0 %v761
      %920 = vmatprep.subr.mxu0 0.0
      %921 = vmatpush1.msra.mxu0 %v760
      %922 = vmatprep.subr.mxu0 0.0
      %923 = vmatpush1.msra.mxu0 %v759
      %924 = vmatprep.subr.mxu0 0.0
      %925 = vmatpush1.msra.mxu0 %v758
      %926 = vmatprep.subr.mxu0 0.0
      %927 = vmatpush1.msra.mxu0 %v757
      %928 = vmatprep.subr.mxu0 0.0
      %929 = vmatpush1.msra.mxu0 %v756
      %930 = vmatprep.subr.mxu0 0.0
      %931 = vmatpush1.msra.mxu0 %v755
      %932 = vmatprep.subr.mxu0 0.0
      %933 = vmatpush1.msra.mxu0 %v754
      %934 = vmatprep.subr.mxu0 0.0
      %935 = vmatpush1.msra.mxu0 %v753
      %936 = vmatprep.subr.mxu0 0.0
      %937 = vmatpush1.msra.mxu0 %v752
      %938 = vmatprep.subr.mxu0 0.0
      %939 = vmatpush1.msra.mxu0 %v751
      %940 = vmatprep.subr.mxu0 0.0
      %941 = vmatpush1.msra.mxu0 %v750
      %942 = vmatprep.subr.mxu0 0.0
      %943 = vmatpush1.msra.mxu0 %v749
      %944 = vmatprep.subr.mxu0 0.0
      %945 = vmatpush1.msra.mxu0 %v748
      %946 = vmatprep.subr.mxu0 0.0
      %947 = vmatpush2.msra.mxu0 %v779
      %948 = vmatprep.subr.mxu0 0.0
      %949 = vmatpush2.msra.mxu0 %v778
      %950 = vmatprep.subr.mxu0 0.0
      %951 = vmatpush2.msra.mxu0 %v777
      %952 = vmatprep.subr.mxu0 0.0
      %953 = vmatpush2.msra.mxu0 %v776
      %954 = vmatprep.subr.mxu0 0.0
      %955 = vmatpush2.msra.mxu0 %v775
      %956 = vmatprep.subr.mxu0 0.0
      %957 = vmatpush2.msra.mxu0 %v774
      %958 = vmatprep.subr.mxu0 0.0
      %959 = vmatpush2.msra.mxu0 %v773
      %960 = vmatprep.subr.mxu0 0.0
      %961 = vmatpush2.msra.mxu0 %v772
      %962 = vmatprep.subr.mxu0 0.0
      %963 = vmatpush2.msra.mxu0 %v771
      %964 = vmatprep.subr.mxu0 0.0
      %965 = vmatpush2.msra.mxu0 %v770
      %966 = vmatprep.subr.mxu0 0.0
      %967 = vmatpush2.msra.mxu0 %v769
      %968 = vmatprep.subr.mxu0 0.0
      %969 = vmatpush2.msra.mxu0 %v768
      %970 = vmatprep.subr.mxu0 0.0
      %971 = vmatpush2.msra.mxu0 %v767
      %972 = vmatprep.subr.mxu0 0.0
      %973 = vmatpush2.msra.mxu0 %v766
      %974 = vmatprep.subr.mxu0 0.0
      %975 = vmatpush2.msra.mxu0 %v765
      %976 = vmatprep.subr.mxu0 0.0
      %977 = vmatpush2.msra.mxu0 %v764
      %978 = vmatprep.mubr.f32.mxu0 %v711
      %979 = vmatmul.mubr.f32.gmra.mxu0 %v710
      %v980 = vpop.f32.mrf.mxu0
      %v981 = vadd.f32 %v911, %v980
      %v982 = vpop.f32.mrf.mxu0
      %983 = vdwg.mxu0
      %984 = vmatprep.subr.mxu0 0.0
      %985 = vmatpush1.msra.mxu0 %v795
      %986 = vmatprep.subr.mxu0 0.0
      %987 = vmatpush1.msra.mxu0 %v794
      %988 = vmatprep.subr.mxu0 0.0
      %989 = vmatpush1.msra.mxu0 %v793
      %990 = vmatprep.subr.mxu0 0.0
      %991 = vmatpush1.msra.mxu0 %v792
      %992 = vmatprep.subr.mxu0 0.0
      %993 = vmatpush1.msra.mxu0 %v791
      %994 = vmatprep.subr.mxu0 0.0
      %995 = vmatpush1.msra.mxu0 %v790
      %996 = vmatprep.subr.mxu0 0.0
      %997 = vmatpush1.msra.mxu0 %v789
      %998 = vmatprep.subr.mxu0 0.0
      %999 = vmatpush1.msra.mxu0 %v788
      %1000 = vmatprep.subr.mxu0 0.0
      %1001 = vmatpush1.msra.mxu0 %v787
      %1002 = vmatprep.subr.mxu0 0.0
      %1003 = vmatpush1.msra.mxu0 %v786
      %1004 = vmatprep.subr.mxu0 0.0
      %1005 = vmatpush1.msra.mxu0 %v785
      %1006 = vmatprep.subr.mxu0 0.0
      %1007 = vmatpush1.msra.mxu0 %v784
      %1008 = vmatprep.subr.mxu0 0.0
      %1009 = vmatpush1.msra.mxu0 %v783
      %1010 = vmatprep.subr.mxu0 0.0
      %1011 = vmatpush1.msra.mxu0 %v782
      %1012 = vmatprep.subr.mxu0 0.0
      %1013 = vmatpush1.msra.mxu0 %v781
      %1014 = vmatprep.subr.mxu0 0.0
      %1015 = vmatpush1.msra.mxu0 %v780
      %1016 = vmatprep.subr.mxu0 0.0
      %1017 = vmatpush2.msra.mxu0 %v811
      %1018 = vmatprep.subr.mxu0 0.0
      %1019 = vmatpush2.msra.mxu0 %v810
      %1020 = vmatprep.subr.mxu0 0.0
      %1021 = vmatpush2.msra.mxu0 %v809
      %1022 = vmatprep.subr.mxu0 0.0
      %1023 = vmatpush2.msra.mxu0 %v808
      %1024 = vmatprep.subr.mxu0 0.0
      %1025 = vmatpush2.msra.mxu0 %v807
      %1026 = vmatprep.subr.mxu0 0.0
      %1027 = vmatpush2.msra.mxu0 %v806
      %1028 = vmatprep.subr.mxu0 0.0
      %1029 = vmatpush2.msra.mxu0 %v805
      %1030 = vmatprep.subr.mxu0 0.0
      %1031 = vmatpush2.msra.mxu0 %v804
      %1032 = vmatprep.subr.mxu0 0.0
      %1033 = vmatpush2.msra.mxu0 %v803
      %1034 = vmatprep.subr.mxu0 0.0
      %1035 = vmatpush2.msra.mxu0 %v802
      %1036 = vmatprep.subr.mxu0 0.0
      %1037 = vmatpush2.msra.mxu0 %v801
      %1038 = vmatprep.subr.mxu0 0.0
      %1039 = vmatpush2.msra.mxu0 %v800
      %1040 = vmatprep.subr.mxu0 0.0
      %1041 = vmatpush2.msra.mxu0 %v799
      %1042 = vmatprep.subr.mxu0 0.0
      %1043 = vmatpush2.msra.mxu0 %v798
      %1044 = vmatprep.subr.mxu0 0.0
      %1045 = vmatpush2.msra.mxu0 %v797
      %1046 = vmatprep.subr.mxu0 0.0
      %1047 = vmatpush2.msra.mxu0 %v796
      %1048 = vmatprep.mubr.f32.mxu0 %v713
      %1049 = vmatmul.mubr.f32.gmra.mxu0 %v712
      %v1050 = vpop.f32.mrf.mxu0
      %v1051 = vadd.f32 %v981, %v1050
      %v1052 = vpop.f32.mrf.mxu0
      %1053 = vdwg.mxu0
      %1054 = vmatprep.subr.mxu0 0.0
      %1055 = vmatpush1.msra.mxu0 %v827
      %1056 = vmatprep.subr.mxu0 0.0
      %1057 = vmatpush1.msra.mxu0 %v826
      %1058 = vmatprep.subr.mxu0 0.0
      %1059 = vmatpush1.msra.mxu0 %v825
      %1060 = vmatprep.subr.mxu0 0.0
      %1061 = vmatpush1.msra.mxu0 %v824
      %1062 = vmatprep.subr.mxu0 0.0
      %1063 = vmatpush1.msra.mxu0 %v823
      %1064 = vmatprep.subr.mxu0 0.0
      %1065 = vmatpush1.msra.mxu0 %v822
      %1066 = vmatprep.subr.mxu0 0.0
      %1067 = vmatpush1.msra.mxu0 %v821
      %1068 = vmatprep.subr.mxu0 0.0
      %1069 = vmatpush1.msra.mxu0 %v820
      %1070 = vmatprep.subr.mxu0 0.0
      %1071 = vmatpush1.msra.mxu0 %v819
      %1072 = vmatprep.subr.mxu0 0.0
      %1073 = vmatpush1.msra.mxu0 %v818
      %1074 = vmatprep.subr.mxu0 0.0
      %1075 = vmatpush1.msra.mxu0 %v817
      %1076 = vmatprep.subr.mxu0 0.0
      %1077 = vmatpush1.msra.mxu0 %v816
      %1078 = vmatprep.subr.mxu0 0.0
      %1079 = vmatpush1.msra.mxu0 %v815
      %1080 = vmatprep.subr.mxu0 0.0
      %1081 = vmatpush1.msra.mxu0 %v814
      %1082 = vmatprep.subr.mxu0 0.0
      %1083 = vmatpush1.msra.mxu0 %v813
      %1084 = vmatprep.subr.mxu0 0.0
      %1085 = vmatpush1.msra.mxu0 %v812
      %1086 = vmatprep.subr.mxu0 0.0
      %1087 = vmatpush2.msra.mxu0 %v843
      %1088 = vmatprep.subr.mxu0 0.0
      %1089 = vmatpush2.msra.mxu0 %v842
      %1090 = vmatprep.subr.mxu0 0.0
      %1091 = vmatpush2.msra.mxu0 %v841
      %1092 = vmatprep.subr.mxu0 0.0
      %1093 = vmatpush2.msra.mxu0 %v840
      %1094 = vmatprep.subr.mxu0 0.0
      %1095 = vmatpush2.msra.mxu0 %v839
      %1096 = vmatprep.subr.mxu0 0.0
      %1097 = vmatpush2.msra.mxu0 %v838
      %1098 = vmatprep.subr.mxu0 0.0
      %1099 = vmatpush2.msra.mxu0 %v837
      %1100 = vmatprep.subr.mxu0 0.0
      %1101 = vmatpush2.msra.mxu0 %v836
      %1102 = vmatprep.subr.mxu0 0.0
      %1103 = vmatpush2.msra.mxu0 %v835
      %1104 = vmatprep.subr.mxu0 0.0
      %1105 = vmatpush2.msra.mxu0 %v834
      %1106 = vmatprep.subr.mxu0 0.0
      %1107 = vmatpush2.msra.mxu0 %v833
      %1108 = vmatprep.subr.mxu0 0.0
      %1109 = vmatpush2.msra.mxu0 %v832
      %1110 = vmatprep.subr.mxu0 0.0
      %1111 = vmatpush2.msra.mxu0 %v831
      %1112 = vmatprep.subr.mxu0 0.0
      %1113 = vmatpush2.msra.mxu0 %v830
      %1114 = vmatprep.subr.mxu0 0.0
      %1115 = vmatpush2.msra.mxu0 %v829
      %1116 = vmatprep.subr.mxu0 0.0
      %1117 = vmatpush2.msra.mxu0 %v828
      %1118 = vmatprep.mubr.f32.mxu0 %v715
      %1119 = vmatmul.mubr.f32.gmra.mxu0 %v714
      %v1120 = vpop.f32.mrf.mxu0
      %v1121 = vadd.f32 %v1051, %v1120
      %v1122 = vpop.f32.mrf.mxu0
      %1123 = vdwg.mxu0
      %vm1124 = vcmp.eq.s32.totalorder %v651, 5
      %v1125 = vsel %vm1124, %v691, %v1121
      %vm1126 = vcmask 64512
      %1127 = vst.msk [vmem:[%s280] sm:$0xff] %vm1126, %v1125
      %p1128 = scmp.lt.s32.totalorder %s19, 15
      %s1129 = scalar_select %p1128, %s19, 15
      %p1130 = scmp.lt.s32.totalorder %s20, 0
      %s1131 = scalar_select %p1130, %s20, 0
      %s1132 = sadd.s32 %s1131, %s1129
      %s1133 = smul.addr %s1132, 8
      %s1134 = scalar_lea.vmem %s4, %s1133
      // Predicated region
      $region37: #{_lambda_.1} parent=35 // pred_check
        %p1135 = pneg %p153
      $region38: #{_lambda_.1} parent=35 // pred_check_branch
        %1137 = sbr.rel (%p1135) target = $region40
      $region39: #{_lambda_.1} parent=35 // pred_region
        _
      $region40: #{_lambda_.1} parent=35 // pred_fallthru
        _
    $region36: #{_lambda_.1} parent=5 // pred_fallthru
      _
    %p1138 = scmp.le.s32.totalorder 2, %s10
    // Predicated region
    $region41: #{_lambda_.1} parent=5 // pred_check
      %p1139 = pneg %p1138
    $region42: #{_lambda_.1} parent=5 // pred_check_branch
      %1141 = sbr.rel (%p1139) target = $region44
    $region43: #{_lambda_.1} parent=5 // pred_region
      %s1142 = ssub.s32 %s10, 2
      // Predicated region
      $region45: #{_lambda_.1} parent=43 // pred_check
        %p1143 = pneg %p159
      $region46: #{_lambda_.1} parent=43 // pred_check_branch
        %1145 = sbr.rel (%p1143) target = $region48
      $region47: #{_lambda_.1} parent=43 // pred_region
        %p1146 = scmp.lt.s32.totalorder %s21, 15
        %s1147 = scalar_select %p1146, %s21, 15
        %p1148 = scmp.lt.s32.totalorder %s22, 0
        %s1149 = scalar_select %p1148, %s22, 0
        %s1150 = sadd.s32 %s1149, %s1147
        %s1151 = smul.addr %s1150, 8
        %s1152 = scalar_lea.vmem %s4, %s1151
      $region48: #{_lambda_.1} parent=43 // pred_fallthru
        _
    $region44: #{_lambda_.1} parent=5 // pred_fallthru
      _
  $region6: #{_lambda_.1} parent=0 // loop_footer
    %s14 = sadd.s32 1, %s10
  $region7: #{_lambda_.1} parent=0 // loop_footer_branch
    %9 = sbr.rel target = $region3
  $region8: #{_lambda_.1} parent=0 // loop_exit
    _

</llo_original>
